<compile_context>
chip_gen: v5e
topology: v5e:2x2
jax: 0.10.0
libtpu: 0.0.40
codegen_flags: <defaults>
</compile_context>

<pallas_src>
import functools

import jax
import jax.numpy as jnp
from jax.experimental import pallas as pl
from jax.experimental.pallas import tpu as pltpu

LANE = 128
SUBLANE = 8


def _round_up(n, m):
    return ((n + m - 1) // m) * m


def ddpg_actor_kernel(x_ref, w0_ref, b0_ref, w1_ref, b1_ref, w2_ref, b2_ref, o_ref):
    # x_ref / w*_ref are bf16 (MXU operands), biases are f32; accumulate in f32.
    # fc0 + relu
    h0 = jnp.dot(x_ref[...], w0_ref[...], preferred_element_type=jnp.float32)
    h0 = jnp.maximum(h0 + b0_ref[...], 0.0)
    # fc1 + relu
    h1 = jnp.dot(h0.astype(w1_ref.dtype), w1_ref[...], preferred_element_type=jnp.float32)
    h1 = jnp.maximum(h1 + b1_ref[...], 0.0)
    # fc2 + tanh (tanh lands on the EUP slot; keep it in f32)
    h2 = jnp.dot(h1.astype(w2_ref.dtype), w2_ref[...], preferred_element_type=jnp.float32)
    o_ref[...] = jnp.tanh(h2 + b2_ref[...]).astype(o_ref.dtype)


@functools.partial(jax.jit, static_argnames=("compute_dtype",))
def ddpg_actor_forward(x, params, compute_dtype=jnp.bfloat16):
    """x: (B, state_dim) float32. params: dict of w0,b0,w1,b1,w2,b2 (f32)."""
    w0, b0, w1, b1, w2, b2 = (params[k] for k in ("w0", "b0", "w1", "b1", "w2", "b2"))
    B, S = x.shape
    H0 = w0.shape[1]            # 128
    H1 = w1.shape[1]            # 64
    A = w2.shape[1]             # action_dim

    # Lane-dense padding of the input/output feature dims.
    S_pad = _round_up(S, LANE)
    A_pad = _round_up(A, LANE)

    # Batch tile: multiple of 8 sublanes, capped at 256 to keep h0/h1 in vregs.
    TB = 256 if B >= 256 else _round_up(B, SUBLANE)
    B_pad = _round_up(B, TB)
    grid = (B_pad // TB,)

    # Host-side padding + cast of MXU operands to bf16 (f32 accumulation in-kernel).
    xp = jnp.zeros((B_pad, S_pad), compute_dtype).at[:B, :S].set(x.astype(compute_dtype))
    w0p = jnp.zeros((S_pad, H0), compute_dtype).at[:S, :].set(w0.astype(compute_dtype))
    w1p = w1.astype(compute_dtype)
    w2p = jnp.zeros((H1, A_pad), compute_dtype).at[:, :A].set(w2.astype(compute_dtype))
    b2p = jnp.zeros((1, A_pad), jnp.float32).at[:, :A].set(b2)

    out_padded = pl.pallas_call(
        ddpg_actor_kernel,
        out_shape=jax.ShapeDtypeStruct((B_pad, A_pad), jnp.float32),
        grid=grid,
        in_specs=[
            pl.BlockSpec((TB, S_pad), lambda i: (i, 0)),     # x tile: streams with grid
            pl.BlockSpec((S_pad, H0), lambda i: (0, 0)),     # weights/biases: VMEM-resident
            pl.BlockSpec((1, H0), lambda i: (0, 0)),
            pl.BlockSpec((H0, H1), lambda i: (0, 0)),
            pl.BlockSpec((1, H1), lambda i: (0, 0)),
            pl.BlockSpec((H1, A_pad), lambda i: (0, 0)),
            pl.BlockSpec((1, A_pad), lambda i: (0, 0)),
        ],
        out_specs=pl.BlockSpec((TB, A_pad), lambda i: (i, 0)),
        compiler_params=pltpu.CompilerParams(dimension_semantics=("parallel",)),
    )(xp, w0p, b0, w1p, b1, w2p, b2p)

    return out_padded[:B, :A]


def init_params(key, state_dim, action_dim):
    """Deterministic init mimicking PyTorch Linear default (U[-1/sqrt(in), 1/sqrt(in)])."""
    ks = jax.random.split(key, 6)

    def linear(kw, kb, fan_in, fan_out):
        bound = 1.0 / jnp.sqrt(jnp.float32(fan_in))
        w = jax.random.uniform(kw, (fan_in, fan_out), jnp.float32, -bound, bound)
        b = jax.random.uniform(kb, (1, fan_out), jnp.float32, -bound, bound)
        return w, b

    w0, b0 = linear(ks[0], ks[1], state_dim, 128)
    w1, b1 = linear(ks[2], ks[3], 128, 64)
    w2, b2 = linear(ks[4], ks[5], 64, action_dim)
    return {"w0": w0, "b0": b0, "w1": w1, "b1": b1, "w2": w2, "b2": b2}


def reference_forward_f32(x, p):
    h0 = jnp.maximum(x @ p["w0"] + p["b0"], 0.0)
    h1 = jnp.maximum(h0 @ p["w1"] + p["b1"], 0.0)
    return jnp.tanh(h1 @ p["w2"] + p["b2"])


def reference_forward_bf16(x, p):
    """Matches the kernel's bf16-operand / f32-accumulate numerics."""
    cd = jnp.bfloat16
    h0 = jnp.dot(x.astype(cd), p["w0"].astype(cd), preferred_element_type=jnp.float32)
    h0 = jnp.maximum(h0 + p["b0"], 0.0)
    h1 = jnp.dot(h0.astype(cd), p["w1"].astype(cd), preferred_element_type=jnp.float32)
    h1 = jnp.maximum(h1 + p["b1"], 0.0)
    h2 = jnp.dot(h1.astype(cd), p["w2"].astype(cd), preferred_element_type=jnp.float32)
    return jnp.tanh(h2 + p["b2"])


if __name__ == "__main__":
    key = jax.random.PRNGKey(0)
    k_x, k_p, k_x2 = jax.random.split(key, 3)

    batch = 8
    state_dim = 16
    action_dim = 4

    x = jax.random.normal(k_x, (batch, state_dim), jnp.float32)
    params = init_params(k_p, state_dim, action_dim)

    out = jax.block_until_ready(ddpg_actor_forward(x, params))
    assert out.shape == (batch, action_dim)
    # Tight check vs. a reference using the same bf16-operand numerics.
    ref_bf16 = jax.block_until_ready(reference_forward_bf16(x, params))
    assert jnp.allclose(out, ref_bf16, atol=2e-3, rtol=2e-3)
    # Looser check vs. the pure-f32 reference (bf16 operand rounding).
    ref_f32 = jax.block_until_ready(reference_forward_f32(x, params))
    assert jnp.allclose(out, ref_f32, atol=3e-2, rtol=3e-2)

    # Second check: batch that exercises grid > 1 and padded rows/cols.
    batch2 = 300
    x2 = jax.random.normal(k_x2, (batch2, state_dim), jnp.float32)
    out2 = jax.block_until_ready(ddpg_actor_forward(x2, params))
    assert out2.shape == (batch2, action_dim)
    ref2 = jax.block_until_ready(reference_forward_bf16(x2, params))
    assert jnp.allclose(out2, ref2, atol=2e-3, rtol=2e-3)

    print("KERNEL_OK")
</pallas_src>

<mosaic_0001>
module attributes {stable_mosaic.version = 11 : i64} {
  func.func @ddpg_actor_kernel(%arg0: i32, %arg1: memref<8x128xbf16, #tpu.memory_space<vmem>>, %arg2: memref<128x128xbf16, #tpu.memory_space<vmem>>, %arg3: memref<1x128xf32, #tpu.memory_space<vmem>>, %arg4: memref<128x64xbf16, #tpu.memory_space<vmem>>, %arg5: memref<1x64xf32, #tpu.memory_space<vmem>>, %arg6: memref<64x128xbf16, #tpu.memory_space<vmem>>, %arg7: memref<1x128xf32, #tpu.memory_space<vmem>>, %arg8: memref<8x128xf32, #tpu.memory_space<vmem>>) attributes {dimension_semantics = [#tpu.dimension_semantics<parallel>], iteration_bounds = array<i64: 1>, scalar_prefetch = 0 : i64, scratch_operands = 0 : i64, tpu.core_type = #tpu.core_type<tc>, window_params = [{transform_indices = @transform_0, window_bounds = array<i64: 8, 128>}, {pipeline_mode = #tpu.pipeline_mode<synchronous>, transform_indices = @transform_1, window_bounds = array<i64: 128, 128>}, {pipeline_mode = #tpu.pipeline_mode<synchronous>, transform_indices = @transform_2, window_bounds = array<i64: 1, 128>}, {pipeline_mode = #tpu.pipeline_mode<synchronous>, transform_indices = @transform_3, window_bounds = array<i64: 128, 64>}, {pipeline_mode = #tpu.pipeline_mode<synchronous>, transform_indices = @transform_4, window_bounds = array<i64: 1, 64>}, {pipeline_mode = #tpu.pipeline_mode<synchronous>, transform_indices = @transform_5, window_bounds = array<i64: 64, 128>}, {pipeline_mode = #tpu.pipeline_mode<synchronous>, transform_indices = @transform_6, window_bounds = array<i64: 1, 128>}, {transform_indices = @transform_7, window_bounds = array<i64: 8, 128>}]} {
    %c0 = arith.constant 0 : index
    %c0_0 = arith.constant 0 : index
    %0 = vector.load %arg1[%c0, %c0_0] : memref<8x128xbf16, #tpu.memory_space<vmem>>, vector<8x128xbf16>
    %c0_1 = arith.constant 0 : index
    %c0_2 = arith.constant 0 : index
    %1 = vector.load %arg2[%c0_1, %c0_2] : memref<128x128xbf16, #tpu.memory_space<vmem>>, vector<128x128xbf16>
    %cst = arith.constant dense<0.000000e+00> : vector<8x128xf32>
    %2 = tpu.matmul %0, %1, %cst {dimension_numbers = #tpu.dot_dimension_numbers<[1], [0], [0], [1], [0, 0, 1, 1], [], []>} : vector<8x128xbf16>, vector<128x128xbf16>, vector<8x128xf32> -> vector<8x128xf32>
    %c0_3 = arith.constant 0 : index
    %c0_4 = arith.constant 0 : index
    %3 = vector.load %arg3[%c0_3, %c0_4] : memref<1x128xf32, #tpu.memory_space<vmem>>, vector<1x128xf32>
    %4 = vector.broadcast %3 : vector<1x128xf32> to vector<8x128xf32>
    %5 = arith.addf %2, %4 : vector<8x128xf32>
    %cst_5 = arith.constant 0.000000e+00 : f32
    %6 = vector.broadcast %cst_5 : f32 to vector<8x128xf32>
    %7 = arith.maximumf %5, %6 : vector<8x128xf32>
    %8 = arith.truncf %7 : vector<8x128xf32> to vector<8x128xbf16>
    %c0_6 = arith.constant 0 : index
    %c0_7 = arith.constant 0 : index
    %9 = vector.load %arg4[%c0_6, %c0_7] : memref<128x64xbf16, #tpu.memory_space<vmem>>, vector<128x64xbf16>
    %cst_8 = arith.constant dense<0.000000e+00> : vector<8x64xf32>
    %10 = tpu.matmul %8, %9, %cst_8 {dimension_numbers = #tpu.dot_dimension_numbers<[1], [0], [0], [1], [0, 0, 1, 1], [], []>} : vector<8x128xbf16>, vector<128x64xbf16>, vector<8x64xf32> -> vector<8x64xf32>
    %c0_9 = arith.constant 0 : index
    %c0_10 = arith.constant 0 : index
    %11 = vector.load %arg5[%c0_9, %c0_10] : memref<1x64xf32, #tpu.memory_space<vmem>>, vector<1x64xf32>
    %12 = vector.broadcast %11 : vector<1x64xf32> to vector<8x64xf32>
    %13 = arith.addf %10, %12 : vector<8x64xf32>
    %cst_11 = arith.constant 0.000000e+00 : f32
    %14 = vector.broadcast %cst_11 : f32 to vector<8x64xf32>
    %15 = arith.maximumf %13, %14 : vector<8x64xf32>
    %16 = arith.truncf %15 : vector<8x64xf32> to vector<8x64xbf16>
    %c0_12 = arith.constant 0 : index
    %c0_13 = arith.constant 0 : index
    %17 = vector.load %arg6[%c0_12, %c0_13] : memref<64x128xbf16, #tpu.memory_space<vmem>>, vector<64x128xbf16>
    %cst_14 = arith.constant dense<0.000000e+00> : vector<8x128xf32>
    %18 = tpu.matmul %16, %17, %cst_14 {dimension_numbers = #tpu.dot_dimension_numbers<[1], [0], [0], [1], [0, 0, 1, 1], [], []>} : vector<8x64xbf16>, vector<64x128xbf16>, vector<8x128xf32> -> vector<8x128xf32>
    %c0_15 = arith.constant 0 : index
    %c0_16 = arith.constant 0 : index
    %19 = vector.load %arg7[%c0_15, %c0_16] : memref<1x128xf32, #tpu.memory_space<vmem>>, vector<1x128xf32>
    %20 = vector.broadcast %19 : vector<1x128xf32> to vector<8x128xf32>
    %21 = arith.addf %18, %20 : vector<8x128xf32>
    %22 = math.tanh %21 : vector<8x128xf32>
    %c0_17 = arith.constant 0 : index
    %c0_18 = arith.constant 0 : index
    %23 = vector.load %arg8[%c0_17, %c0_18] : memref<8x128xf32, #tpu.memory_space<vmem>>, vector<8x128xf32>
    tpu.vector_store %arg8[%c0_17, %c0_18], %22 {strides = array<i32>} : memref<8x128xf32, #tpu.memory_space<vmem>>, vector<8x128xf32>,
    return
  }
  func.func @transform_0(%arg0: i32) -> (i32, i32) {
    %c0_i32 = arith.constant 0 : i32
    %c0_i32_0 = arith.constant 0 : i32
    return %arg0, %c0_i32 : i32, i32
  }
  func.func @transform_1(%arg0: i32) -> (i32, i32) {
    %c0_i32 = arith.constant 0 : i32
    %c0_i32_0 = arith.constant 0 : i32
    %c0_i32_1 = arith.constant 0 : i32
    return %c0_i32, %c0_i32_0 : i32, i32
  }
  func.func @transform_2(%arg0: i32) -> (i32, i32) {
    %c0_i32 = arith.constant 0 : i32
    %c0_i32_0 = arith.constant 0 : i32
    %c0_i32_1 = arith.constant 0 : i32
    return %c0_i32, %c0_i32_0 : i32, i32
  }
  func.func @transform_3(%arg0: i32) -> (i32, i32) {
    %c0_i32 = arith.constant 0 : i32
    %c0_i32_0 = arith.constant 0 : i32
    %c0_i32_1 = arith.constant 0 : i32
    return %c0_i32, %c0_i32_0 : i32, i32
  }
  func.func @transform_4(%arg0: i32) -> (i32, i32) {
    %c0_i32 = arith.constant 0 : i32
    %c0_i32_0 = arith.constant 0 : i32
    %c0_i32_1 = arith.constant 0 : i32
    return %c0_i32, %c0_i32_0 : i32, i32
  }
  func.func @transform_5(%arg0: i32) -> (i32, i32) {
    %c0_i32 = arith.constant 0 : i32
    %c0_i32_0 = arith.constant 0 : i32
    %c0_i32_1 = arith.constant 0 : i32
    return %c0_i32, %c0_i32_0 : i32, i32
  }
  func.func @transform_6(%arg0: i32) -> (i32, i32) {
    %c0_i32 = arith.constant 0 : i32
    %c0_i32_0 = arith.constant 0 : i32
    %c0_i32_1 = arith.constant 0 : i32
    return %c0_i32, %c0_i32_0 : i32, i32
  }
  func.func @transform_7(%arg0: i32) -> (i32, i32) {
    %c0_i32 = arith.constant 0 : i32
    %c0_i32_0 = arith.constant 0 : i32
    return %arg0, %c0_i32 : i32, i32
  }
}

</mosaic_0001>

<llo_original>
// kernel: ddpg_actor_forward.1
$region0: #{ddpg_actor_forward.1}
  #allocation0 [shape = 'u32[]', space=smem, size = 0x4, offset = 0x4, fixed_abs, tag = 'smem constant byte address 0x4 - core index']
  #allocation1 [shape = 'u32[72,128]{1,0:T(1,128)}', space=vmem, size = 0x9000, scoped, tag = 'internal scratch']
  %s0 = inlined_call_operand.vmem [shape: bf16[8,128], index: 0, kind: input, shape index: {}]
  %s1 = inlined_call_operand.vmem [shape: bf16[128,128], index: 1, kind: input, shape index: {}]
  %s2 = inlined_call_operand.vmem [shape: f32[1,128], index: 2, kind: input, shape index: {}]
  %s3 = inlined_call_operand.vmem [shape: bf16[128,64], index: 3, kind: input, shape index: {}]
  %s4 = inlined_call_operand.vmem [shape: f32[1,64], index: 4, kind: input, shape index: {}]
  %s5 = inlined_call_operand.vmem [shape: bf16[64,128], index: 5, kind: input, shape index: {}]
  %s6 = inlined_call_operand.vmem [shape: f32[1,128], index: 6, kind: input, shape index: {}]
  %s7 = inlined_call_operand.vmem [shape: f32[8,128], index: 7, kind: output, shape index: {}]
  %s8 = sld [smem:[#allocation0]]
  $region38: #{ddpg_actor_forward.1} parent=0
    _
  %s10 = ssub.s32 1, %s8
  %s11 = scalar_select 0, %s10, %s8
  // Predicated region
  $region2: #{ddpg_actor_forward.1} parent=0 // pred_check
    _
  $region3: #{ddpg_actor_forward.1} parent=0 // pred_check_branch
    %13 = sbr.rel (0) target = $region5
  $region4: #{ddpg_actor_forward.1} parent=0 // pred_region
    _
  $region5: #{ddpg_actor_forward.1} parent=0 // pred_fallthru
    _
  // Predicated region
  $region6: #{ddpg_actor_forward.1} parent=0 // pred_check
    _
  $region7: #{ddpg_actor_forward.1} parent=0 // pred_check_branch
    %15 = sbr.rel (0) target = $region9
  $region8: #{ddpg_actor_forward.1} parent=0 // pred_region
    _
  $region9: #{ddpg_actor_forward.1} parent=0 // pred_fallthru
    _
  // Predicated region
  $region10: #{ddpg_actor_forward.1} parent=0 // pred_check
    _
  $region11: #{ddpg_actor_forward.1} parent=0 // pred_check_branch
    %17 = sbr.rel (0) target = $region13
  $region12: #{ddpg_actor_forward.1} parent=0 // pred_region
    _
  $region13: #{ddpg_actor_forward.1} parent=0 // pred_fallthru
    _
  // Predicated region
  $region14: #{ddpg_actor_forward.1} parent=0 // pred_check
    _
  $region15: #{ddpg_actor_forward.1} parent=0 // pred_check_branch
    %19 = sbr.rel (0) target = $region17
  $region16: #{ddpg_actor_forward.1} parent=0 // pred_region
    _
  $region17: #{ddpg_actor_forward.1} parent=0 // pred_fallthru
    _
  // Predicated region
  $region18: #{ddpg_actor_forward.1} parent=0 // pred_check
    _
  $region19: #{ddpg_actor_forward.1} parent=0 // pred_check_branch
    %21 = sbr.rel (0) target = $region21
  $region20: #{ddpg_actor_forward.1} parent=0 // pred_region
    _
  $region21: #{ddpg_actor_forward.1} parent=0 // pred_fallthru
    _
  // Predicated region
  $region22: #{ddpg_actor_forward.1} parent=0 // pred_check
    _
  $region23: #{ddpg_actor_forward.1} parent=0 // pred_check_branch
    %23 = sbr.rel (0) target = $region25
  $region24: #{ddpg_actor_forward.1} parent=0 // pred_region
    _
  $region25: #{ddpg_actor_forward.1} parent=0 // pred_fallthru
    _
  // Predicated region
  $region26: #{ddpg_actor_forward.1} parent=0 // pred_check
    _
  $region27: #{ddpg_actor_forward.1} parent=0 // pred_check_branch
    %25 = sbr.rel (0) target = $region29
  $region28: #{ddpg_actor_forward.1} parent=0 // pred_region
    _
  $region29: #{ddpg_actor_forward.1} parent=0 // pred_fallthru
    _
  %v27 = vld [vmem:[%s0] sm:$0xf]
  %v28 = vld [vmem:[%s1] sm:$0xf]
  %v29 = vld [vmem:[%s1 + $0x4] sm:$0xf]
  %v30 = vld [vmem:[%s1 + $0x8] sm:$0xf]
  %v31 = vld [vmem:[%s1 + $0xc] sm:$0xf]
  %v32 = vld [vmem:[%s1 + $0x10] sm:$0xf]
  %v33 = vld [vmem:[%s1 + $0x14] sm:$0xf]
  %v34 = vld [vmem:[%s1 + $0x18] sm:$0xf]
  %v35 = vld [vmem:[%s1 + $0x1c] sm:$0xf]
  %v36 = vld [vmem:[%s1 + $0x20] sm:$0xf]
  %v37 = vld [vmem:[%s1 + $0x24] sm:$0xf]
  %v38 = vld [vmem:[%s1 + $0x28] sm:$0xf]
  %v39 = vld [vmem:[%s1 + $0x2c] sm:$0xf]
  %v40 = vld [vmem:[%s1 + $0x30] sm:$0xf]
  %v41 = vld [vmem:[%s1 + $0x34] sm:$0xf]
  %v42 = vld [vmem:[%s1 + $0x38] sm:$0xf]
  %v43 = vld [vmem:[%s1 + $0x3c] sm:$0xf]
  %v44 = vld [vmem:[%s2] sm:$0x1]
  %v46 = vperm.slane %v44, 0
  %v64 = vunpack.c.l.b16 %v28
  %v65 = vunpack.c.l.b16 %v29
  %v66 = vunpack.c.l.b16 %v30
  %v67 = vunpack.c.l.b16 %v31
  %v68 = vunpack.c.l.b16 %v32
  %v69 = vunpack.c.l.b16 %v33
  %v70 = vunpack.c.l.b16 %v34
  %v71 = vunpack.c.l.b16 %v35
  %v72 = vunpack.c.l.b16 %v36
  %v73 = vunpack.c.l.b16 %v37
  %v74 = vunpack.c.l.b16 %v38
  %v75 = vunpack.c.l.b16 %v39
  %v76 = vunpack.c.l.b16 %v40
  %v77 = vunpack.c.l.b16 %v41
  %v78 = vunpack.c.l.b16 %v42
  %v79 = vunpack.c.l.b16 %v43
  %v80 = vpack.c.b16 %v65, %v64
  %v81 = vpack.c.b16 %v67, %v66
  %v82 = vpack.c.b16 %v69, %v68
  %v83 = vpack.c.b16 %v71, %v70
  %v84 = vpack.c.b16 %v73, %v72
  %v85 = vpack.c.b16 %v75, %v74
  %v86 = vpack.c.b16 %v77, %v76
  %v87 = vpack.c.b16 %v79, %v78
  %96 = vmatpush.bf16.msra.mxu0 %v87
  %97 = vmatpush.bf16.msra.mxu0 %v86
  %98 = vmatpush.bf16.msra.mxu0 %v85
  %99 = vmatpush.bf16.msra.mxu0 %v84
  %100 = vmatpush.bf16.msra.mxu0 %v83
  %101 = vmatpush.bf16.msra.mxu0 %v82
  %102 = vmatpush.bf16.msra.mxu0 %v81
  %103 = vmatpush.bf16.msra.mxu0 %v80
  %104 = vmatmul.bf16.gmra.mxu0 %v27
  %v105 = vpop.f32.mrf.mxu0
  %v106 = vadd.f32 %v46, %v105
  %v107 = vpop.f32.mrf.mxu0
  %108 = vdwg.mxu0
  %v109 = vmax.f32 %v106, 0.0
  %v110 = vpack.c.bf16 %v109, %v109
  %v111 = vld [vmem:[%s3] sm:$0xf]
  %v112 = vld [vmem:[%s3 + $0x4] sm:$0xf]
  %v113 = vld [vmem:[%s3 + $0x8] sm:$0xf]
  %v114 = vld [vmem:[%s3 + $0xc] sm:$0xf]
  %v115 = vld [vmem:[%s3 + $0x10] sm:$0xf]
  %v116 = vld [vmem:[%s3 + $0x14] sm:$0xf]
  %v117 = vld [vmem:[%s3 + $0x18] sm:$0xf]
  %v118 = vld [vmem:[%s3 + $0x1c] sm:$0xf]
  %v119 = vld [vmem:[%s3 + $0x20] sm:$0xf]
  %v120 = vld [vmem:[%s3 + $0x24] sm:$0xf]
  %v121 = vld [vmem:[%s3 + $0x28] sm:$0xf]
  %v122 = vld [vmem:[%s3 + $0x2c] sm:$0xf]
  %v123 = vld [vmem:[%s3 + $0x30] sm:$0xf]
  %v124 = vld [vmem:[%s3 + $0x34] sm:$0xf]
  %v125 = vld [vmem:[%s3 + $0x38] sm:$0xf]
  %v126 = vld [vmem:[%s3 + $0x3c] sm:$0xf]
  %v127 = vld [vmem:[%s4] sm:$0x1]
  %v129 = vperm.slane %v127, 0
  %v147 = vunpack.c.l.b16 %v111
  %v148 = vunpack.c.l.b16 %v112
  %v149 = vunpack.c.l.b16 %v113
  %v150 = vunpack.c.l.b16 %v114
  %v151 = vunpack.c.l.b16 %v115
  %v152 = vunpack.c.l.b16 %v116
  %v153 = vunpack.c.l.b16 %v117
  %v154 = vunpack.c.l.b16 %v118
  %v155 = vunpack.c.l.b16 %v119
  %v156 = vunpack.c.l.b16 %v120
  %v157 = vunpack.c.l.b16 %v121
  %v158 = vunpack.c.l.b16 %v122
  %v159 = vunpack.c.l.b16 %v123
  %v160 = vunpack.c.l.b16 %v124
  %v161 = vunpack.c.l.b16 %v125
  %v162 = vunpack.c.l.b16 %v126
  %v163 = vpack.c.b16 %v148, %v147
  %v164 = vpack.c.b16 %v150, %v149
  %v165 = vpack.c.b16 %v152, %v151
  %v166 = vpack.c.b16 %v154, %v153
  %v167 = vpack.c.b16 %v156, %v155
  %v168 = vpack.c.b16 %v158, %v157
  %v169 = vpack.c.b16 %v160, %v159
  %v170 = vpack.c.b16 %v162, %v161
  %179 = vmatpush.bf16.msra.mxu0 %v170
  %180 = vmatpush.bf16.msra.mxu0 %v169
  %181 = vmatpush.bf16.msra.mxu0 %v168
  %182 = vmatpush.bf16.msra.mxu0 %v167
  %183 = vmatpush.bf16.msra.mxu0 %v166
  %184 = vmatpush.bf16.msra.mxu0 %v165
  %185 = vmatpush.bf16.msra.mxu0 %v164
  %186 = vmatpush.bf16.msra.mxu0 %v163
  %187 = vmatmul.bf16.gmra.mxu0 %v110
  %v188 = vpop.f32.mrf.mxu0
  %v189 = vadd.f32 %v129, %v188
  %v190 = vpop.f32.mrf.mxu0
  %191 = vdwg.mxu0
  %v192 = vmax.f32 %v189, 0.0
  %v193 = vpack.c.bf16 %v192, %v192
  %v194 = vld [vmem:[%s5] sm:$0xf]
  %v195 = vld [vmem:[%s5 + $0x4] sm:$0xf]
  %v196 = vld [vmem:[%s5 + $0x8] sm:$0xf]
  %v197 = vld [vmem:[%s5 + $0xc] sm:$0xf]
  %v198 = vld [vmem:[%s5 + $0x10] sm:$0xf]
  %v199 = vld [vmem:[%s5 + $0x14] sm:$0xf]
  %v200 = vld [vmem:[%s5 + $0x18] sm:$0xf]
  %v201 = vld [vmem:[%s5 + $0x1c] sm:$0xf]
  %v202 = vld [vmem:[%s6] sm:$0x1]
  %v204 = vperm.slane %v202, 0
  %v214 = vunpack.c.l.b16 %v194
  %v215 = vunpack.c.l.b16 %v195
  %v216 = vunpack.c.l.b16 %v196
  %v217 = vunpack.c.l.b16 %v197
  %v218 = vunpack.c.l.b16 %v198
  %v219 = vunpack.c.l.b16 %v199
  %v220 = vunpack.c.l.b16 %v200
  %v221 = vunpack.c.l.b16 %v201
  %v222 = vpack.c.b16 %v215, %v214
  %v223 = vpack.c.b16 %v217, %v216
  %v224 = vpack.c.b16 %v219, %v218
  %v225 = vpack.c.b16 %v221, %v220
  %vm230 = vcmask 523264
  %v232 = vsel %vm230, %v193, 0
  %234 = vmatpush.bf16.msra.mxu0 0
  %235 = vmatpush.bf16.msra.mxu0 0
  %236 = vmatpush.bf16.msra.mxu0 0
  %237 = vmatpush.bf16.msra.mxu0 0
  %238 = vmatpush.bf16.msra.mxu0 %v225
  %239 = vmatpush.bf16.msra.mxu0 %v224
  %240 = vmatpush.bf16.msra.mxu0 %v223
  %241 = vmatpush.bf16.msra.mxu0 %v222
  %242 = vmatmul.bf16.gmra.mxu0 %v232
  %v243 = vpop.f32.mrf.mxu0
  %v244 = vadd.f32 %v204, %v243
  %v245 = vpop.f32.mrf.mxu0
  %246 = vdwg.mxu0
  %v247 = vtanh.pop %v244
  %248 = vst [vmem:[%s7] sm:$0xff] %v247
  // Predicated region
  $region30: #{ddpg_actor_forward.1} parent=0 // pred_check
    _
  $region31: #{ddpg_actor_forward.1} parent=0 // pred_check_branch
    %250 = sbr.rel (0) target = $region33
  $region32: #{ddpg_actor_forward.1} parent=0 // pred_region
    _
  $region33: #{ddpg_actor_forward.1} parent=0 // pred_fallthru
    _
  // Predicated region
  $region34: #{ddpg_actor_forward.1} parent=0 // pred_check
    _
  $region35: #{ddpg_actor_forward.1} parent=0 // pred_check_branch
    %252 = sbr.rel (0) target = $region37
  $region36: #{ddpg_actor_forward.1} parent=0 // pred_region
    _
  $region37: #{ddpg_actor_forward.1} parent=0 // pred_fallthru
    _

</llo_original>
